<compile_context>
chip_gen: v7x
topology: tpu7x:2x2x1
jax: 0.10.0
libtpu: 0.0.40
codegen_flags: <defaults>
</compile_context>

<pallas_src>
import functools

import jax
import jax.numpy as jnp
from jax.experimental import pallas as pl
from jax.experimental.pallas import tpu as pltpu


# ----------------------------- helpers ------------------------------------- #

def _round_up(v, m):
    return ((v + m - 1) // m) * m


def _pad2d(a, rows, cols):
    r, c = a.shape
    return jnp.pad(a, ((0, rows - r), (0, cols - c)))


def _choose_row_tile(n_cols, bytes_per_elem, budget_bytes=20 << 20, max_tile=512):
    """Largest power-of-two row tile whose double-buffered A_hat slab fits the budget."""
    tile = max_tile
    while tile > 8 and 2 * tile * n_cols * bytes_per_elem > budget_bytes:
        tile //= 2
    return max(tile, 8)


def _vmem_limit(nbytes):
    # derived need + margin, clamped to [16 MiB, 64 MiB] (v7x physical ceiling)
    return int(min(max(nbytes + (4 << 20), 16 << 20), 64 << 20))


# ----------------------------- kernels ------------------------------------- #

def _proj_kernel(x_ref, w_ref, out_ref):
    # z = x @ W   (f32 accumulation on the MXU), tiled over node rows.
    out_ref[...] = jnp.dot(
        x_ref[...], w_ref[...], preferred_element_type=jnp.float32
    ).astype(out_ref.dtype)


def _agg_proj_kernel(adj_ref, z_ref, b_ref, w_ref, out_ref):
    # One GCNConv row tile fused with the NEXT layer's projection:
    #   out_tile = relu(A_hat[tile] @ z + b) @ W_next
    h = jnp.dot(adj_ref[...], z_ref[...], preferred_element_type=jnp.float32)
    h = jnp.maximum(h + b_ref[...], 0.0)
    # dropout(p=0.5, training=False) -> identity in eval mode
    out_ref[...] = jnp.dot(
        h.astype(w_ref.dtype), w_ref[...], preferred_element_type=jnp.float32
    ).astype(out_ref.dtype)


def _agg_head_kernel(adj_ref, z_ref, b2_ref, w3_ref, b3_ref, out_ref, *,
                     num_classes):
    # Second GCNConv row tile + Linear head + masked softmax, fused.
    h = jnp.dot(adj_ref[...], z_ref[...], preferred_element_type=jnp.float32)
    h = jnp.maximum(h + b2_ref[...], 0.0)
    # dropout(p=0.5, training=False) -> identity in eval mode
    logits = jnp.dot(
        h.astype(w3_ref.dtype), w3_ref[...], preferred_element_type=jnp.float32
    ) + b3_ref[...]
    # class dim is padded to a lane-dense multiple of 128; mask the pad lanes.
    lane = jax.lax.broadcasted_iota(jnp.int32, logits.shape, 1)
    logits = jnp.where(lane < num_classes, logits, -1e30)
    m = jnp.max(logits, axis=1, keepdims=True)
    e = jnp.exp(logits - m)
    denom = jnp.sum(e, axis=1, keepdims=True)
    inv = pl.reciprocal(denom, approx=True)       # EUP slot (otherwise idle)
    inv = inv * (2.0 - denom * inv)               # one Newton step -> ~f32-exact
    out_ref[...] = (e * inv).astype(out_ref.dtype)


# ----------------------------- wrapper ------------------------------------- #

def gcn_forward(adj, x, w1, b1, w2, b2, w3, b3, *, matmul_dtype=jnp.float32):
    N, F = x.shape
    H = w1.shape[1]
    C = w3.shape[1]

    mm_bytes = jnp.dtype(matmul_dtype).itemsize

    # Lane-dense padded dims (multiples of 128).
    F_p = _round_up(F, 128)
    H_p = _round_up(H, 128)
    C_p = _round_up(C, 128)

    # Row tile for the A_hat stream (double-buffered, v7x-safe budget).
    tile_m = _choose_row_tile(_round_up(N, 8), mm_bytes)
    tile_m = min(tile_m, _round_up(N, 8))
    N_p = _round_up(N, tile_m)
    n_tiles = N_p // tile_m

    # Zero-pad everything (zeros are exact no-ops for the matmuls; pad class
    # lanes are masked inside the softmax, pad node rows are sliced off below).
    adj_p = _pad2d(adj, N_p, N_p).astype(matmul_dtype)
    x_p = _pad2d(x, N_p, F_p).astype(matmul_dtype)
    w1_p = _pad2d(w1, F_p, H_p).astype(matmul_dtype)
    w2_p = _pad2d(w2, H_p, H_p).astype(matmul_dtype)
    w3_p = _pad2d(w3, H_p, C_p).astype(matmul_dtype)
    b1_p = _pad2d(b1, 1, H_p).astype(jnp.float32)
    b2_p = _pad2d(b2, 1, H_p).astype(jnp.float32)
    b3_p = _pad2d(b3, 1, C_p).astype(jnp.float32)

    parallel = ("parallel",)

    # ---- z1 = x @ W1   (tiled over node rows, W1 resident) ----
    proj_vmem = (F_p * H_p + 2 * tile_m * (F_p + H_p)) * mm_bytes
    z1 = pl.pallas_call(
        _proj_kernel,
        out_shape=jax.ShapeDtypeStruct((N_p, H_p), matmul_dtype),
        grid=(n_tiles,),
        in_specs=[
            pl.BlockSpec((tile_m, F_p), lambda i: (i, 0)),
            pl.BlockSpec((F_p, H_p), lambda i: (0, 0)),
        ],
        out_specs=pl.BlockSpec((tile_m, H_p), lambda i: (i, 0)),
        compiler_params=pltpu.CompilerParams(
            dimension_semantics=parallel,
            vmem_limit_bytes=_vmem_limit(proj_vmem)),
        cost_estimate=pl.CostEstimate(
            flops=2 * N_p * F_p * H_p,
            transcendentals=0,
            bytes_accessed=(N_p * F_p + F_p * H_p + N_p * H_p) * mm_bytes),
    )(x_p, w1_p)

    # ---- z2 = relu(A_hat @ z1 + b1) @ W2   (= h1 @ W2, fused) ----
    agg1_vmem = ((N_p * H_p + H_p * H_p) * mm_bytes + H_p * 4
                 + 2 * tile_m * N_p * mm_bytes + 2 * tile_m * H_p * mm_bytes)
    z2 = pl.pallas_call(
        _agg_proj_kernel,
        out_shape=jax.ShapeDtypeStruct((N_p, H_p), matmul_dtype),
        grid=(n_tiles,),
        in_specs=[
            pl.BlockSpec((tile_m, N_p), lambda i: (i, 0)),   # A_hat row tile (streamed)
            pl.BlockSpec((N_p, H_p), lambda i: (0, 0)),      # z1 resident
            pl.BlockSpec((1, H_p), lambda i: (0, 0)),        # b1
            pl.BlockSpec((H_p, H_p), lambda i: (0, 0)),      # W2 resident
        ],
        out_specs=pl.BlockSpec((tile_m, H_p), lambda i: (i, 0)),
        compiler_params=pltpu.CompilerParams(
            dimension_semantics=parallel,
            vmem_limit_bytes=_vmem_limit(agg1_vmem)),
        cost_estimate=pl.CostEstimate(
            flops=2 * N_p * N_p * H_p + 2 * N_p * H_p * H_p,
            transcendentals=0,
            bytes_accessed=(N_p * N_p + 2 * N_p * H_p + H_p * H_p) * mm_bytes),
    )(adj_p, z1, b1_p, w2_p)

    # ---- out = softmax(relu(A_hat @ z2 + b2) @ W3 + b3)   (fused head) ----
    agg2_vmem = ((N_p * H_p + H_p * C_p) * mm_bytes + (H_p + C_p) * 4
                 + 2 * tile_m * N_p * mm_bytes + 2 * tile_m * C_p * 4)
    out_p = pl.pallas_call(
        functools.partial(_agg_head_kernel, num_classes=C),
        out_shape=jax.ShapeDtypeStruct((N_p, C_p), jnp.float32),
        grid=(n_tiles,),
        in_specs=[
            pl.BlockSpec((tile_m, N_p), lambda i: (i, 0)),   # A_hat row tile (streamed)
            pl.BlockSpec((N_p, H_p), lambda i: (0, 0)),      # z2 resident
            pl.BlockSpec((1, H_p), lambda i: (0, 0)),        # b2
            pl.BlockSpec((H_p, C_p), lambda i: (0, 0)),      # W3 resident
            pl.BlockSpec((1, C_p), lambda i: (0, 0)),        # b3
        ],
        out_specs=pl.BlockSpec((tile_m, C_p), lambda i: (i, 0)),
        compiler_params=pltpu.CompilerParams(
            dimension_semantics=parallel,
            vmem_limit_bytes=_vmem_limit(agg2_vmem)),
        cost_estimate=pl.CostEstimate(
            flops=2 * N_p * N_p * H_p + 2 * N_p * H_p * C_p,
            transcendentals=N_p * C_p,
            bytes_accessed=((N_p * N_p + N_p * H_p + H_p * C_p) * mm_bytes
                            + N_p * C_p * 4)),
    )(adj_p, z2, b2_p, w3_p, b3_p)

    return out_p[:N, :C]


# ----------------------------- plain-JAX glue ------------------------------- #

def build_normalized_adjacency(edge_index, num_nodes):
    """A_hat = D^{-1/2} (A + I) D^{-1/2}   (GCNConv's symmetric norm)."""
    src, dst = edge_index[0], edge_index[1]
    adj = jnp.zeros((num_nodes, num_nodes), jnp.float32)
    adj = adj.at[src, dst].set(1.0)
    adj = adj.at[dst, src].set(1.0)                     # undirected
    adj = adj + jnp.eye(num_nodes, dtype=jnp.float32)   # self-loops
    adj = jnp.minimum(adj, 1.0)                         # dedupe
    deg = jnp.sum(adj, axis=1)
    d_inv_sqrt = jnp.where(deg > 0, 1.0 / jnp.sqrt(deg), 0.0)
    return adj * d_inv_sqrt[:, None] * d_inv_sqrt[None, :]


def reference_forward(adj, x, w1, b1, w2, b2, w3, b3):
    h = jnp.maximum(adj @ (x @ w1) + b1, 0.0)
    h = jnp.maximum(adj @ (h @ w2) + b2, 0.0)
    logits = h @ w3 + b3
    return jax.nn.softmax(logits, axis=1)


# ----------------------------- test ----------------------------------------- #

if __name__ == "__main__":
    # Small synthetic "Cora-like" problem.
    N = 32            # nodes
    NUM_FEATURES = 16
    HIDDEN = 32
    NUM_CLASSES = 8
    NUM_EDGES = 64

    key = jax.random.PRNGKey(0)
    kx, ke, k1, k2, k3 = jax.random.split(key, 5)

    # node features (row-normalized, like NormalizeFeatures())
    x = jax.random.uniform(kx, (N, NUM_FEATURES), jnp.float32)
    x = x / jnp.clip(jnp.sum(x, axis=1, keepdims=True), 1e-6)

    # random edge_index [2, E]
    edge_index = jax.random.randint(ke, (2, NUM_EDGES), 0, N)
    adj = build_normalized_adjacency(edge_index, N)

    # deterministic parameter init (synthetic, not a checkpoint load)
    w1 = jax.random.normal(k1, (NUM_FEATURES, HIDDEN), jnp.float32) * 0.1
    b1 = jnp.zeros((1, HIDDEN), jnp.float32)
    w2 = jax.random.normal(k2, (HIDDEN, HIDDEN), jnp.float32) * 0.1
    b2 = jnp.zeros((1, HIDDEN), jnp.float32)
    w3 = jax.random.normal(k3, (HIDDEN, NUM_CLASSES), jnp.float32) * 0.1
    b3 = jnp.zeros((1, NUM_CLASSES), jnp.float32)

    ref = reference_forward(adj, x, w1, b1, w2, b2, w3, b3)

    # f32 matmul path — numerically matches the XLA reference.
    out_f32 = jax.block_until_ready(
        gcn_forward(adj, x, w1, b1, w2, b2, w3, b3, matmul_dtype=jnp.float32))
    assert out_f32.shape == (N, NUM_CLASSES)
    assert jnp.allclose(out_f32, ref, atol=1e-5, rtol=1e-5)
    assert jnp.allclose(jnp.sum(out_f32, axis=1), 1.0, atol=1e-4)

    # bf16 matmul path (f32 MXU accumulation) — the fast path on v5e/v6e/v7x.
    out_bf16 = jax.block_until_ready(
        gcn_forward(adj, x, w1, b1, w2, b2, w3, b3, matmul_dtype=jnp.bfloat16))
    assert out_bf16.shape == (N, NUM_CLASSES)
    assert jnp.allclose(out_bf16, ref, atol=3e-2, rtol=3e-2)
    assert jnp.allclose(jnp.sum(out_bf16, axis=1), 1.0, atol=1e-3)

    print("KERNEL_OK")
</pallas_src>

<mosaic_0001>
module attributes {stable_mosaic.version = 11 : i64} {
  func.func @_proj_kernel(%arg0: i32, %arg1: memref<32x128xf32, #tpu.memory_space<vmem>>, %arg2: memref<128x128xf32, #tpu.memory_space<vmem>>, %arg3: memref<32x128xf32, #tpu.memory_space<vmem>>) attributes {dimension_semantics = [#tpu.dimension_semantics<parallel>], iteration_bounds = array<i64: 1>, scalar_prefetch = 0 : i64, scratch_operands = 0 : i64, tpu.core_type = #tpu.core_type<tc>, window_params = [{transform_indices = @transform_0, window_bounds = array<i64: 32, 128>}, {pipeline_mode = #tpu.pipeline_mode<synchronous>, transform_indices = @transform_1, window_bounds = array<i64: 128, 128>}, {transform_indices = @transform_2, window_bounds = array<i64: 32, 128>}]} {
    %c0 = arith.constant 0 : index
    %c0_0 = arith.constant 0 : index
    %0 = vector.load %arg1[%c0, %c0_0] : memref<32x128xf32, #tpu.memory_space<vmem>>, vector<32x128xf32>
    %c0_1 = arith.constant 0 : index
    %c0_2 = arith.constant 0 : index
    %1 = vector.load %arg2[%c0_1, %c0_2] : memref<128x128xf32, #tpu.memory_space<vmem>>, vector<128x128xf32>
    %cst = arith.constant dense<0.000000e+00> : vector<32x128xf32>
    %2 = tpu.matmul %0, %1, %cst {dimension_numbers = #tpu.dot_dimension_numbers<[1], [0], [0], [1], [0, 0, 1, 1], [], []>} : vector<32x128xf32>, vector<128x128xf32>, vector<32x128xf32> -> vector<32x128xf32>
    %c0_3 = arith.constant 0 : index
    %c0_4 = arith.constant 0 : index
    %3 = vector.load %arg3[%c0_3, %c0_4] : memref<32x128xf32, #tpu.memory_space<vmem>>, vector<32x128xf32>
    tpu.vector_store %arg3[%c0_3, %c0_4], %2 {strides = array<i32>} : memref<32x128xf32, #tpu.memory_space<vmem>>, vector<32x128xf32>,
    return
  }
  func.func @transform_0(%arg0: i32) -> (i32, i32) {
    %c0_i32 = arith.constant 0 : i32
    %c0_i32_0 = arith.constant 0 : i32
    return %arg0, %c0_i32 : i32, i32
  }
  func.func @transform_1(%arg0: i32) -> (i32, i32) {
    %c0_i32 = arith.constant 0 : i32
    %c0_i32_0 = arith.constant 0 : i32
    %c0_i32_1 = arith.constant 0 : i32
    return %c0_i32, %c0_i32_0 : i32, i32
  }
  func.func @transform_2(%arg0: i32) -> (i32, i32) {
    %c0_i32 = arith.constant 0 : i32
    %c0_i32_0 = arith.constant 0 : i32
    return %arg0, %c0_i32 : i32, i32
  }
}

</mosaic_0001>

<llo_original>
// kernel: tpu_custom_call.1
$region0: #{tpu_custom_call.1}
  #allocation0 [shape = 'u32[]', space=smem, size = 0x4, offset = 0x4, fixed_abs, tag = 'smem constant byte address 0x4 - core index']
  #allocation1 [shape = 'u32[144,128]{1,0:T(1,128)}', space=vmem, size = 0x12000, scoped, tag = 'internal scratch']
  %s0 = inlined_call_operand.hbm [shape: f32[32,128], index: 0, kind: input, shape index: {}]
  %s1 = inlined_call_operand.hbm [shape: f32[128,128], index: 1, kind: input, shape index: {}]
  %s2 = inlined_call_operand.hbm [shape: f32[32,128], index: 2, kind: output, shape index: {}]
  %s3 = sld [smem:[#allocation0]]
  $region26: #{tpu_custom_call.1} parent=0
    _
  %s5 = ssub.s32 1, %s3
  %s6 = scalar_select 0, %s5, %s3
  $region1: #{tpu_custom_call.1} parent=0
    #allocation2 [shape = 'u8[16384]{0}', space=vmem, size = 0x4000, scoped, tag = 'input window, operand 0, single buffered']
    #allocation3 [shape = 's32[1]{0}', space=sflag, size = 0x4, scoped, tag = 'scoped memory for tpu_custom_call.1']
    #allocation4 [shape = 's32[1]{0}', space=sflag, size = 0x4, scoped, tag = 'scoped memory for tpu_custom_call.1']
    #allocation5 [shape = 'u8[65536]{0}', space=vmem, size = 0x10000, scoped, tag = 'input window, operand 1, single buffered']
    #allocation6 [shape = 's32[1]{0}', space=sflag, size = 0x4, scoped, tag = 'scoped memory for tpu_custom_call.1']
    #allocation7 [shape = 'u8[16384]{0}', space=vmem, size = 0x4000, scoped, tag = 'output window, operand 0, single buffered']
    %7 = vsyncpa [#allocation3], 0
    %8 = vsyncpa [#allocation6], 0
    %9 = vsyncpa [#allocation4], 0
    // Predicated region
    $region2: #{tpu_custom_call.1} parent=1 // pred_check
      _
    $region3: #{tpu_custom_call.1} parent=1 // pred_check_branch
      %11 = sbr.rel (0) target = $region5
    $region4: #{tpu_custom_call.1} parent=1 // pred_region
      %s13 = ssub.s32 512, 512
      %14 = vsyncadd [#allocation3], %s13
      %s15 = sshll.u32 [#allocation2], 4
      %s16 = int_to_ptr.vmem [resolvable:$true] %s15
      %21 = dma.hbm_to_vmem [thread:$0]  %s0, 512, %s16, [#allocation3], 128, 128, 8
    $region5: #{tpu_custom_call.1} parent=1 // pred_fallthru
      _
    // Predicated region
    $region6: #{tpu_custom_call.1} parent=1 // pred_check
      _
    $region7: #{tpu_custom_call.1} parent=1 // pred_check_branch
      %23 = sbr.rel (0) target = $region9
    $region8: #{tpu_custom_call.1} parent=1 // pred_region
      %s25 = ssub.s32 2048, 2048
      %26 = vsyncadd [#allocation6], %s25
      %s27 = sshll.u32 [#allocation5], 4
      %s28 = int_to_ptr.vmem [resolvable:$true] %s27
      %33 = dma.hbm_to_vmem [thread:$0]  %s1, 2048, %s28, [#allocation6], 128, 128, 8
    $region9: #{tpu_custom_call.1} parent=1 // pred_fallthru
      _
    // Predicated region
    $region10: #{tpu_custom_call.1} parent=1 // pred_check
      _
    $region11: #{tpu_custom_call.1} parent=1 // pred_check_branch
      %35 = sbr.rel (0) target = $region13
    $region12: #{tpu_custom_call.1} parent=1 // pred_region
      %36 = dma.done [#allocation3], 512
    $region13: #{tpu_custom_call.1} parent=1 // pred_fallthru
      _
    // Predicated region
    $region14: #{tpu_custom_call.1} parent=1 // pred_check
      _
    $region15: #{tpu_custom_call.1} parent=1 // pred_check_branch
      %38 = sbr.rel (0) target = $region17
    $region16: #{tpu_custom_call.1} parent=1 // pred_region
      %39 = dma.done [#allocation6], 2048
    $region17: #{tpu_custom_call.1} parent=1 // pred_fallthru
      _
    %v40 = vld [vmem:[#allocation2] sm:$0xff]
    %v41 = vld [vmem:[#allocation2 + $0x8] sm:$0xff]
    %v42 = vld [vmem:[#allocation2 + $0x10] sm:$0xff]
    %v43 = vld [vmem:[#allocation2 + $0x18] sm:$0xff]
    %v44 = vld [vmem:[#allocation5] sm:$0xff]
    %v45 = vld [vmem:[#allocation5 + $0x8] sm:$0xff]
    %v46 = vld [vmem:[#allocation5 + $0x10] sm:$0xff]
    %v47 = vld [vmem:[#allocation5 + $0x18] sm:$0xff]
    %v48 = vld [vmem:[#allocation5 + $0x20] sm:$0xff]
    %v49 = vld [vmem:[#allocation5 + $0x28] sm:$0xff]
    %v50 = vld [vmem:[#allocation5 + $0x30] sm:$0xff]
    %v51 = vld [vmem:[#allocation5 + $0x38] sm:$0xff]
    %v52 = vld [vmem:[#allocation5 + $0x40] sm:$0xff]
    %v53 = vld [vmem:[#allocation5 + $0x48] sm:$0xff]
    %v54 = vld [vmem:[#allocation5 + $0x50] sm:$0xff]
    %v55 = vld [vmem:[#allocation5 + $0x58] sm:$0xff]
    %v56 = vld [vmem:[#allocation5 + $0x60] sm:$0xff]
    %v57 = vld [vmem:[#allocation5 + $0x68] sm:$0xff]
    %v58 = vld [vmem:[#allocation5 + $0x70] sm:$0xff]
    %v59 = vld [vmem:[#allocation5 + $0x78] sm:$0xff]
    %60 = vmatprep.subr.mxu0 0.0
    %61 = vmatpush1.msra.mxu0 %v44
    %62 = vmatprep.subr.mxu0 0.0
    %63 = vmatpush1.msra.mxu0 %v45
    %64 = vmatprep.subr.mxu0 0.0
    %65 = vmatpush1.msra.mxu0 %v46
    %66 = vmatprep.subr.mxu0 0.0
    %67 = vmatpush1.msra.mxu0 %v47
    %68 = vmatprep.subr.mxu0 0.0
    %69 = vmatpush1.msra.mxu0 %v48
    %70 = vmatprep.subr.mxu0 0.0
    %71 = vmatpush1.msra.mxu0 %v49
    %72 = vmatprep.subr.mxu0 0.0
    %73 = vmatpush1.msra.mxu0 %v50
    %74 = vmatprep.subr.mxu0 0.0
    %75 = vmatpush1.msra.mxu0 %v51
    %76 = vmatprep.subr.mxu0 0.0
    %77 = vmatpush1.msra.mxu0 %v52
    %78 = vmatprep.subr.mxu0 0.0
    %79 = vmatpush1.msra.mxu0 %v53
    %80 = vmatprep.subr.mxu0 0.0
    %81 = vmatpush1.msra.mxu0 %v54
    %82 = vmatprep.subr.mxu0 0.0
    %83 = vmatpush1.msra.mxu0 %v55
    %84 = vmatprep.subr.mxu0 0.0
    %85 = vmatpush1.msra.mxu0 %v56
    %86 = vmatprep.subr.mxu0 0.0
    %87 = vmatpush1.msra.mxu0 %v57
    %88 = vmatprep.subr.mxu0 0.0
    %89 = vmatpush1.msra.mxu0 %v58
    %90 = vmatprep.subr.mxu0 0.0
    %91 = vmatpush1.msra.mxu0 %v59
    %92 = vmatprep.subr.mxu0 0.0
    %93 = vmatpush1.msra.mxu0 0.0
    %94 = vmatprep.subr.mxu0 0.0
    %95 = vmatpush1.msra.mxu0 0.0
    %96 = vmatprep.subr.mxu0 0.0
    %97 = vmatpush1.msra.mxu0 0.0
    %98 = vmatprep.subr.mxu0 0.0
    %99 = vmatpush1.msra.mxu0 0.0
    %100 = vmatprep.subr.mxu0 0.0
    %101 = vmatpush1.msra.mxu0 0.0
    %102 = vmatprep.subr.mxu0 0.0
    %103 = vmatpush1.msra.mxu0 0.0
    %104 = vmatprep.subr.mxu0 0.0
    %105 = vmatpush1.msra.mxu0 0.0
    %106 = vmatprep.subr.mxu0 0.0
    %107 = vmatpush1.msra.mxu0 0.0
    %108 = vmatprep.subr.mxu0 0.0
    %109 = vmatpush1.msra.mxu0 0.0
    %110 = vmatprep.subr.mxu0 0.0
    %111 = vmatpush1.msra.mxu0 0.0
    %112 = vmatprep.subr.mxu0 0.0
    %113 = vmatpush1.msra.mxu0 0.0
    %114 = vmatprep.subr.mxu0 0.0
    %115 = vmatpush1.msra.mxu0 0.0
    %116 = vmatprep.subr.mxu0 0.0
    %117 = vmatpush1.msra.mxu0 0.0
    %118 = vmatprep.subr.mxu0 0.0
    %119 = vmatpush1.msra.mxu0 0.0
    %120 = vmatprep.subr.mxu0 0.0
    %121 = vmatpush1.msra.mxu0 0.0
    %122 = vmatprep.subr.mxu0 0.0
    %123 = vmatpush1.msra.mxu0 0.0
    %124 = vmatprep.mubr.f32.mxu0 0.0
    %125 = vmatmul.mubr.f32.gmra.mrb[0].mxu0 %v40
    %v126 = vpop.f32.mrb[0].mxu0
    %v127 = vadd.f32 0.0, %v126
    %v128 = vpop.f32.mrb[0].mxu0
    %129 = vmatprep.mubr.f32.mxu0 0.0
    %130 = vmatmul.mubr.f32.gmra.mrb[0].mxu0 %v41
    %v131 = vpop.f32.mrb[0].mxu0
    %v132 = vadd.f32 0.0, %v131
    %v133 = vpop.f32.mrb[0].mxu0
    %134 = vmatprep.mubr.f32.mxu0 0.0
    %135 = vmatmul.mubr.f32.gmra.mrb[0].mxu0 %v42
    %v136 = vpop.f32.mrb[0].mxu0
    %v137 = vadd.f32 0.0, %v136
    %v138 = vpop.f32.mrb[0].mxu0
    %139 = vmatprep.mubr.f32.mxu0 0.0
    %140 = vmatmul.mubr.f32.gmra.mrb[0].mxu0 %v43
    %v141 = vpop.f32.mrb[0].mxu0
    %v142 = vadd.f32 0.0, %v141
    %v143 = vpop.f32.mrb[0].mxu0
    %144 = vdwg.mxu0
    %145 = vst [vmem:[#allocation7] sm:$0xff] %v127
    %146 = vst [vmem:[#allocation7 + $0x8] sm:$0xff] %v132
    %147 = vst [vmem:[#allocation7 + $0x10] sm:$0xff] %v137
    %148 = vst [vmem:[#allocation7 + $0x18] sm:$0xff] %v142
    // Predicated region
    $region18: #{tpu_custom_call.1} parent=1 // pred_check
      _
    $region19: #{tpu_custom_call.1} parent=1 // pred_check_branch
      %150 = sbr.rel (0) target = $region21
    $region20: #{tpu_custom_call.1} parent=1 // pred_region
      %s152 = ssub.s32 512, 512
      %153 = vsyncadd [#allocation4], %s152
      %s154 = sshll.u32 [#allocation7], 4
      %s155 = int_to_ptr.vmem [resolvable:$true] %s154
      %160 = dma.vmem_to_hbm [thread:$0]  %s155, 512, %s2, [#allocation4], 128, 128, 8
    $region21: #{tpu_custom_call.1} parent=1 // pred_fallthru
      _
    // Predicated region
    $region22: #{tpu_custom_call.1} parent=1 // pred_check
      _
    $region23: #{tpu_custom_call.1} parent=1 // pred_check_branch
      %162 = sbr.rel (0) target = $region25
    $region24: #{tpu_custom_call.1} parent=1 // pred_region
      %163 = dma.done [#allocation4], 512
    $region25: #{tpu_custom_call.1} parent=1 // pred_fallthru
      _
    %164 = vsyncpa [#allocation3], 1
    %165 = vsyncpa [#allocation6], 1
    %166 = vsyncpa [#allocation4], 1

</llo_original>
